<compile_context>
chip_gen: v7x
topology: tpu7x:2x2x1
jax: 0.10.0
libtpu: 0.0.40
codegen_flags: <defaults>
</compile_context>

<pallas_src>
import functools

import jax
import jax.numpy as jnp
from jax.experimental import pallas as pl
from jax.experimental.pallas import tpu as pltpu


# ---------------------------------------------------------------------------
# Kernel body
# ---------------------------------------------------------------------------
def _make_convt_kernel(*, C_out_g, stride, T_max, TQ, W, num_l_tiles, shifts,
                       tap_valid, has_bias, compute_dtype, acc_dtype=jnp.float32):
    """One grid step = (batch n, group g, q-tile l).

    Refs:
      x_ref : (1, 1, C_in_g, L_pad)                 zero-padded input slab (NCL)
      w_ref : (1, stride, T_max, C_out_g, C_in_g)   per-(phase, tap) weight matrices
      b_ref : (1, C_out_g, 1)                       only when has_bias
      o_ref : (1, 1, stride, C_out_g, TQ)           phase-major output tile
    """

    def kernel(*refs):
        if has_bias:
            x_ref, w_ref, b_ref, o_ref = refs
        else:
            x_ref, w_ref, o_ref = refs

        # Tile origin along the q (phase-sample) axis.  Aligned (multiple of TQ,
        # TQ % 128 == 0 in the multi-tile case); the small static tap shifts are
        # applied as cheap value slices below.
        if num_l_tiles > 1:
            q0 = pl.multiple_of(pl.program_id(2) * TQ, TQ)
        else:
            q0 = 0

        # One window load per tile; per-tap windows are static sub-slices of it.
        xslab = x_ref[0, 0, :, pl.ds(q0, TQ + W)]            # (C_in_g, TQ + W)
        if compute_dtype is not None:
            xslab = xslab.astype(compute_dtype)

        bias_v = b_ref[0].astype(acc_dtype) if has_bias else None   # (C_out_g, 1)

        for r in range(stride):
            acc = None
            for t in range(T_max):
                if not tap_valid[r][t]:          # tap k = k0[r] + t*stride >= K
                    continue
                s = shifts[r][t]                 # static, 0 <= s <= W
                xwin = xslab[:, s:s + TQ]        # (C_in_g, TQ)
                w_t = w_ref[0, r, t]             # (C_out_g, C_in_g)
                if compute_dtype is not None:
                    w_t = w_t.astype(compute_dtype)
                part = jnp.dot(w_t, xwin, preferred_element_type=acc_dtype)
                acc = part if acc is None else acc + part
            if acc is None:                      # phase with no valid taps (stride > K)
                acc = jnp.zeros((C_out_g, TQ), acc_dtype)
            if bias_v is not None:
                acc = acc + bias_v
            # Dense, unmasked store of this phase's tile (lane axis = q).
            o_ref[0, 0, r] = acc.astype(o_ref.dtype)

    return kernel


# ---------------------------------------------------------------------------
# Wrapper
# ---------------------------------------------------------------------------
def conv_transpose1d(x, weight, bias=None, *, stride=1, padding=0,
                     output_padding=0, groups=1, compute_dtype=None,
                     q_tile=256):
    """Exact F.conv_transpose1d semantics.  x: (N, C_in, L_in)."""
    N, C_in, L_in = x.shape
    w_cin, C_out_g, K = weight.shape
    assert w_cin == C_in and C_in % groups == 0
    C_in_g = C_in // groups
    C_out = C_out_g * groups
    L_out = (L_in - 1) * stride - 2 * padding + K + output_padding
    assert L_out >= 1, "empty output"

    # ---- static polyphase bookkeeping (Python ints, resolved at trace time) ----
    k0 = [(r + padding) % stride for r in range(stride)]    # first tap of phase r
    dr = [(r + padding) // stride for r in range(stride)]   # input offset of phase r
    T_r = [0 if k0[r] >= K else -(-(K - k0[r]) // stride) for r in range(stride)]
    T_max = max(1, max(T_r))
    tap_valid = [[(k0[r] + t * stride) < K for t in range(T_max)]
                 for r in range(stride)]

    n_max = -(-L_out // stride)                              # q positions per phase

    # ---- q-tiling: lane-dense (128-multiple) output tiles, or one full tile ----
    if n_max <= max(q_tile, 128):
        TQ = n_max                                           # block == full dim -> OK
        num_l_tiles = 1
    else:
        TQ = 128 * max(1, q_tile // 128)                     # multiple of 128
        num_l_tiles = -(-n_max // TQ)                        # last tile ragged (masked)
    n_ceil = num_l_tiles * TQ

    pad_left = max(0, (T_max - 1) - min(dr))
    pad_right = max(0, max(dr) + n_ceil - L_in)
    L_pad = pad_left + L_in + pad_right
    shifts = [[dr[r] - t + pad_left for t in range(T_max)] for r in range(stride)]
    W = max([shifts[r][t] for r in range(stride) for t in range(T_max)
             if tap_valid[r][t]] or [0])                     # window halo (static)

    # ---- weight re-layout: (groups, stride, T_max, C_out_g, C_in_g)  (tiny) ----
    wg = weight.reshape(groups, C_in_g, C_out_g, K)
    rows = []
    for r in range(stride):
        taps = []
        for t in range(T_max):
            k = k0[r] + t * stride
            if k < K:
                taps.append(jnp.transpose(wg[:, :, :, k], (0, 2, 1)))
            else:                                            # never read by the kernel
                taps.append(jnp.zeros((groups, C_out_g, C_in_g), weight.dtype))
        rows.append(jnp.stack(taps, axis=1))                 # (groups, T_max, Cog, Cig)
    w_taps = jnp.stack(rows, axis=1)                         # (groups, stride, T_max, Cog, Cig)

    # ---- zero-pad the input along L once, in HBM (no in-kernel pad/concat) ----
    x_pad = jnp.pad(x, ((0, 0), (0, 0), (pad_left, pad_right)))
    x_pad = x_pad.reshape(N, groups, C_in_g, L_pad)

    kernel = _make_convt_kernel(
        C_out_g=C_out_g, stride=stride, T_max=T_max, TQ=TQ, W=W,
        num_l_tiles=num_l_tiles, shifts=shifts, tap_valid=tap_valid,
        has_bias=bias is not None, compute_dtype=compute_dtype)

    in_specs = [
        pl.BlockSpec((1, 1, C_in_g, L_pad), lambda n, g, l: (n, g, 0, 0)),
        pl.BlockSpec((1, stride, T_max, C_out_g, C_in_g),
                     lambda n, g, l: (g, 0, 0, 0, 0)),
    ]
    args = [x_pad, w_taps]
    if bias is not None:
        in_specs.append(pl.BlockSpec((1, C_out_g, 1), lambda n, g, l: (g, 0, 0)))
        args.append(bias.reshape(groups, C_out_g, 1))

    out_spec = pl.BlockSpec((1, 1, stride, C_out_g, TQ),
                            lambda n, g, l: (n, g, 0, 0, l))

    y5 = pl.pallas_call(
        kernel,
        out_shape=jax.ShapeDtypeStruct((N, groups, stride, C_out_g, n_max), x.dtype),
        grid=(N, groups, num_l_tiles),
        in_specs=in_specs,
        out_specs=out_spec,
        compiler_params=pltpu.CompilerParams(
            dimension_semantics=("parallel", "parallel", "parallel"),
            vmem_limit_bytes=48 * 1024 * 1024),
    )(*args)

    # ---- phase interleave lo = q*stride + r: one O(L) XLA relayout pass ----
    y = jnp.transpose(y5, (0, 1, 3, 4, 2))                   # (N, g, Cog, n_max, stride)
    y = y.reshape(N, groups, C_out_g, n_max * stride)[..., :L_out]
    return y.reshape(N, C_out, L_out)


# ---------------------------------------------------------------------------
# References (for correctness checks only)
# ---------------------------------------------------------------------------
def _reference_loops(x, weight, bias, stride, padding, output_padding, groups):
    """Direct-formula reference (slow; small shapes only)."""
    N, C_in, L_in = x.shape
    _, C_out_g, K = weight.shape
    C_out = C_out_g * groups
    C_in_g = C_in // groups
    L_out = (L_in - 1) * stride - 2 * padding + K + output_padding
    hp = jax.lax.Precision.HIGHEST
    y = jnp.zeros((N, C_out, L_out), x.dtype)
    for g in range(groups):
        for k in range(K):
            for li in range(L_in):
                lo = li * stride - padding + k
                if 0 <= lo < L_out:
                    xg = x[:, g * C_in_g:(g + 1) * C_in_g, li]
                    wgk = weight[g * C_in_g:(g + 1) * C_in_g, :, k]
                    y = y.at[:, g * C_out_g:(g + 1) * C_out_g, lo].add(
                        jnp.matmul(xg, wgk, precision=hp))
    if bias is not None:
        y = y + bias[None, :, None]
    return y


def _reference_lax(x, weight, bias, stride, padding, output_padding, groups):
    """conv_transpose == lhs-dilated conv with flipped/transposed kernel."""
    C_in, C_out_g, K = weight.shape
    C_in_g = C_in // groups
    w = weight.reshape(groups, C_in_g, C_out_g, K)
    w = jnp.transpose(w, (0, 2, 1, 3)).reshape(groups * C_out_g, C_in_g, K)
    w = jnp.flip(w, axis=-1)
    y = jax.lax.conv_general_dilated(
        x, w, window_strides=(1,),
        padding=[(K - 1 - padding, K - 1 - padding + output_padding)],
        lhs_dilation=(stride,), rhs_dilation=(1,),
        dimension_numbers=("NCH", "OIH", "NCH"),
        feature_group_count=groups, precision=jax.lax.Precision.HIGHEST)
    if bias is not None:
        y = y + bias[None, :, None]
    return y


# ---------------------------------------------------------------------------
# Self-test
# ---------------------------------------------------------------------------
def _run_case(name, *, N, C_in, C_out, K, stride, padding, output_padding,
              groups, use_bias, L_in, key, reference):
    kx, kw, kb = jax.random.split(key, 3)
    x = jax.random.normal(kx, (N, C_in, L_in), jnp.float32)
    weight = jax.random.normal(kw, (C_in, C_out // groups, K), jnp.float32)
    bias = jax.random.normal(kb, (C_out,), jnp.float32) if use_bias else None

    fwd = jax.jit(functools.partial(
        conv_transpose1d, stride=stride, padding=padding,
        output_padding=output_padding, groups=groups))
    y = fwd(x, weight, bias)
    jax.block_until_ready(y)

    L_out = (L_in - 1) * stride - 2 * padding + K + output_padding
    assert y.shape == (N, C_out, L_out), (name, y.shape)
    y_ref = reference(x, weight, bias, stride, padding, output_padding, groups)
    assert jnp.allclose(y, y_ref, atol=1e-3, rtol=1e-3), f"mismatch: {name}"


if __name__ == "__main__":
    keys = jax.random.split(jax.random.PRNGKey(0), 4)

    # Case 1: the benchmark module configuration (no bias).
    _run_case("base", N=2, C_in=8, C_out=16, K=3, stride=2, padding=1,
              output_padding=1, groups=1, use_bias=False, L_in=16,
              key=keys[0], reference=_reference_loops)
    # Case 2: grouped + bias + stride 3 (previously untested paths).
    _run_case("grouped_bias", N=2, C_in=6, C_out=8, K=4, stride=3, padding=2,
              output_padding=1, groups=2, use_bias=True, L_in=10,
              key=keys[1], reference=_reference_loops)
    # Case 3: stride-1 path (no phase interleave at all).
    _run_case("stride1", N=2, C_in=4, C_out=6, K=3, stride=1, padding=1,
              output_padding=0, groups=1, use_bias=True, L_in=16,
              key=keys[2], reference=_reference_loops)
    # Case 4: longer sequence exercising the multi-q-tile (pipelined, 128-aligned,
    # ragged-last-block) path.
    _run_case("tiled", N=1, C_in=8, C_out=8, K=5, stride=2, padding=2,
              output_padding=1, groups=1, use_bias=False, L_in=300,
              key=keys[3], reference=_reference_lax)

    print("KERNEL_OK")
</pallas_src>

<mosaic_0001>
module attributes {stable_mosaic.version = 11 : i64} {
  func.func @kernel(%arg0: i32, %arg1: i32, %arg2: i32, %arg3: memref<1x1x8x18xf32, #tpu.memory_space<vmem>>, %arg4: memref<1x2x2x16x8xf32, #tpu.memory_space<vmem>>, %arg5: memref<1x1x2x16x16xf32, #tpu.memory_space<vmem>>) attributes {dimension_semantics = [#tpu.dimension_semantics<parallel>, #tpu.dimension_semantics<parallel>, #tpu.dimension_semantics<parallel>], iteration_bounds = array<i64: 2, 1, 1>, scalar_prefetch = 0 : i64, scratch_operands = 0 : i64, tpu.core_type = #tpu.core_type<tc>, window_params = [{transform_indices = @transform_0, window_bounds = array<i64: 1, 1, 8, 18>}, {transform_indices = @transform_1, window_bounds = array<i64: 1, 2, 2, 16, 8>}, {transform_indices = @transform_2, window_bounds = array<i64: 1, 1, 2, 16, 16>}]} {
    %c0 = arith.constant 0 : index
    %c0_0 = arith.constant 0 : index
    %c0_1 = arith.constant 0 : index
    %c0_2 = arith.constant 0 : index
    %0 = vector.load %arg3[%c0, %c0_0, %c0_1, %c0_2] : memref<1x1x8x18xf32, #tpu.memory_space<vmem>>, vector<1x1x8x18xf32>
    %1 = vector.shape_cast %0 : vector<1x1x8x18xf32> to vector<8x18xf32>
    %2 = vector.extract_strided_slice %1 {offsets = [0, 1], sizes = [8, 16], strides = [1, 1]} : vector<8x18xf32> to vector<8x16xf32>
    %c0_3 = arith.constant 0 : index
    %c0_4 = arith.constant 0 : index
    %c0_5 = arith.constant 0 : index
    %c0_6 = arith.constant 0 : index
    %c0_7 = arith.constant 0 : index
    %3 = vector.load %arg4[%c0_3, %c0_4, %c0_5, %c0_6, %c0_7] : memref<1x2x2x16x8xf32, #tpu.memory_space<vmem>>, vector<1x1x1x16x8xf32>
    %4 = vector.shape_cast %3 : vector<1x1x1x16x8xf32> to vector<16x8xf32>
    %cst = arith.constant dense<0.000000e+00> : vector<16x16xf32>
    %5 = tpu.matmul %4, %2, %cst {dimension_numbers = #tpu.dot_dimension_numbers<[1], [0], [0], [1], [0, 0, 1, 1], [], []>} : vector<16x8xf32>, vector<8x16xf32>, vector<16x16xf32> -> vector<16x16xf32>
    %c0_8 = arith.constant 0 : index
    %c0_9 = arith.constant 0 : index
    %c0_10 = arith.constant 0 : index
    %c0_11 = arith.constant 0 : index
    %c0_12 = arith.constant 0 : index
    %6 = vector.load %arg5[%c0_8, %c0_9, %c0_10, %c0_11, %c0_12] : memref<1x1x2x16x16xf32, #tpu.memory_space<vmem>>, vector<1x1x1x16x16xf32>
    %7 = vector.shape_cast %6 : vector<1x1x1x16x16xf32> to vector<16x16xf32>
    %8 = vector.shape_cast %5 : vector<16x16xf32> to vector<1x1x1x16x16xf32>
    tpu.vector_store %arg5[%c0_8, %c0_9, %c0_10, %c0_11, %c0_12], %8 {strides = array<i32>} : memref<1x1x2x16x16xf32, #tpu.memory_space<vmem>>, vector<1x1x1x16x16xf32>,
    %9 = vector.extract_strided_slice %1 {offsets = [0, 2], sizes = [8, 16], strides = [1, 1]} : vector<8x18xf32> to vector<8x16xf32>
    %c0_13 = arith.constant 0 : index
    %c1 = arith.constant 1 : index
    %c0_14 = arith.constant 0 : index
    %c0_15 = arith.constant 0 : index
    %c0_16 = arith.constant 0 : index
    %10 = vector.load %arg4[%c0_13, %c1, %c0_14, %c0_15, %c0_16] : memref<1x2x2x16x8xf32, #tpu.memory_space<vmem>>, vector<1x1x1x16x8xf32>
    %11 = vector.shape_cast %10 : vector<1x1x1x16x8xf32> to vector<16x8xf32>
    %cst_17 = arith.constant dense<0.000000e+00> : vector<16x16xf32>
    %12 = tpu.matmul %11, %9, %cst_17 {dimension_numbers = #tpu.dot_dimension_numbers<[1], [0], [0], [1], [0, 0, 1, 1], [], []>} : vector<16x8xf32>, vector<8x16xf32>, vector<16x16xf32> -> vector<16x16xf32>
    %13 = vector.extract_strided_slice %1 {offsets = [0, 1], sizes = [8, 16], strides = [1, 1]} : vector<8x18xf32> to vector<8x16xf32>
    %c0_18 = arith.constant 0 : index
    %c1_19 = arith.constant 1 : index
    %c1_20 = arith.constant 1 : index
    %c0_21 = arith.constant 0 : index
    %c0_22 = arith.constant 0 : index
    %14 = vector.load %arg4[%c0_18, %c1_19, %c1_20, %c0_21, %c0_22] : memref<1x2x2x16x8xf32, #tpu.memory_space<vmem>>, vector<1x1x1x16x8xf32>
    %15 = vector.shape_cast %14 : vector<1x1x1x16x8xf32> to vector<16x8xf32>
    %cst_23 = arith.constant dense<0.000000e+00> : vector<16x16xf32>
    %16 = tpu.matmul %15, %13, %cst_23 {dimension_numbers = #tpu.dot_dimension_numbers<[1], [0], [0], [1], [0, 0, 1, 1], [], []>} : vector<16x8xf32>, vector<8x16xf32>, vector<16x16xf32> -> vector<16x16xf32>
    %17 = arith.addf %12, %16 : vector<16x16xf32>
    %c0_24 = arith.constant 0 : index
    %c0_25 = arith.constant 0 : index
    %c1_26 = arith.constant 1 : index
    %c0_27 = arith.constant 0 : index
    %c0_28 = arith.constant 0 : index
    %18 = vector.load %arg5[%c0_24, %c0_25, %c1_26, %c0_27, %c0_28] : memref<1x1x2x16x16xf32, #tpu.memory_space<vmem>>, vector<1x1x1x16x16xf32>
    %19 = vector.shape_cast %18 : vector<1x1x1x16x16xf32> to vector<16x16xf32>
    %20 = vector.shape_cast %17 : vector<16x16xf32> to vector<1x1x1x16x16xf32>
    tpu.vector_store %arg5[%c0_24, %c0_25, %c1_26, %c0_27, %c0_28], %20 {strides = array<i32>} : memref<1x1x2x16x16xf32, #tpu.memory_space<vmem>>, vector<1x1x1x16x16xf32>,
    return
  }
  func.func @transform_0(%arg0: i32, %arg1: i32, %arg2: i32) -> (i32, i32, i32, i32) {
    %c0_i32 = arith.constant 0 : i32
    %c0_i32_0 = arith.constant 0 : i32
    %c0_i32_1 = arith.constant 0 : i32
    return %arg0, %arg1, %c0_i32, %c0_i32_0 : i32, i32, i32, i32
  }
  func.func @transform_1(%arg0: i32, %arg1: i32, %arg2: i32) -> (i32, i32, i32, i32, i32) {
    %c0_i32 = arith.constant 0 : i32
    %c0_i32_0 = arith.constant 0 : i32
    %c0_i32_1 = arith.constant 0 : i32
    %c0_i32_2 = arith.constant 0 : i32
    %c0_i32_3 = arith.constant 0 : i32
    return %arg1, %c0_i32, %c0_i32_0, %c0_i32_1, %c0_i32_2 : i32, i32, i32, i32, i32
  }
  func.func @transform_2(%arg0: i32, %arg1: i32, %arg2: i32) -> (i32, i32, i32, i32, i32) {
    %c0_i32 = arith.constant 0 : i32
    %c0_i32_0 = arith.constant 0 : i32
    %c0_i32_1 = arith.constant 0 : i32
    return %arg0, %arg1, %c0_i32, %c0_i32_0, %arg2 : i32, i32, i32, i32, i32
  }
}

</mosaic_0001>

<llo_original>
// kernel: conv_transpose1d.1
$region0: #{conv_transpose1d.1}
  #allocation0 [shape = 'u32[]', space=smem, size = 0x4, offset = 0x4, fixed_abs, tag = 'smem constant byte address 0x4 - core index']
  #allocation1 [shape = 'u32[144,128]{1,0:T(1,128)}', space=vmem, size = 0x12000, scoped, tag = 'internal scratch']
  %s0 = inlined_call_operand.vmem [shape: f32[2,1,8,18], index: 0, kind: input, shape index: {}]
  %s1 = inlined_call_operand.vmem [shape: f32[1,2,2,16,8], index: 1, kind: input, shape index: {}]
  %s2 = inlined_call_operand.vmem [shape: f32[2,1,2,16,16], index: 2, kind: output, shape index: {}]
  %s3 = sld [smem:[#allocation0]]
  $region41: #{conv_transpose1d.1} parent=0
    _
  %s5 = ssub.s32 1, %s3
  %s6 = scalar_select 0, %s5, %s3
  loop: start=0, step=1, limit=4
  $region2: #{conv_transpose1d.1} parent=0 // loop_pre_header
    _
  $region3: #{conv_transpose1d.1} parent=0 // loop_header
    %s8 = sphi 0, %s12
    %p9 = scmp.ge.s32.totalorder %s8, 4
    %s15 = sphi 0, %s34
    %s16 = sphi 0, %s30
    %s17 = sphi 0, %s26
    %s18 = sphi 0, %s15
    %s19 = sphi 0, %s16
    %s20 = sphi 0, %s17
    %s21 = sphi 0, %s18
    %s22 = sphi 0, %s19
    %s23 = sphi 0, %s20
    %s39 = sphi 0, %s41
    %s42 = sphi 0, %s39
    %s43 = sphi 0, %s42
    %s59 = sphi 0, %s43
    %s65 = sphi 0, %s67
    %s68 = sphi 0, %s65
    %s69 = sphi 0, %s68
    %s85 = sphi 0, %s69
    %s95 = sphi 0, %s97
    %s98 = sphi 0, %s95
    %s99 = sphi 0, %s98
    %s115 = sphi 0, %s99
  $region4: #{conv_transpose1d.1} parent=0 // loop_header_branch
    %11 = sbr.rel (%p9) target = $region8
  $region5: #{conv_transpose1d.1} parent=0 // loop_body
    %s13 = ssub.s32 %s8, 1
    %s14 = ssub.s32 %s8, 2
    %s24 = sadd.s32 1, %s17
    %p25 = scmp.ge.s32.totalorder %s24, 1
    %s26 = scalar_select %p25, 0, %s24
    %s27 = sadd.s32 1, %s16
    %s28 = scalar_select %p25, %s27, %s16
    %p29 = scmp.ge.s32.totalorder %s28, 1
    %s30 = scalar_select %p29, 0, %s28
    %s31 = sadd.s32 1, %s15
    %s32 = scalar_select %p29, %s31, %s15
    %p33 = scmp.ge.s32.totalorder %s32, 2
    %s34 = scalar_select %p33, 0, %s32
    %s35 = ssub.s32 %s15, %s34
    %s36 = ssub.s32 %s16, %s30
    %s37 = sor.u32 %s35, %s36
    %p38 = scmp.eq.s32.totalorder %s37, 0
    %s40 = sadd.s32 %s39, 1
    %s41 = scalar_select %p38, %s39, %s40
    %p44 = pneg %p38
    %p45 = scmp.eq.s32.totalorder %s8, 1
    %p46 = por %p44, %p45
    %p47 = scmp.ne.s32.totalorder %s39, %s42
    %p48 = scmp.eq.s32.totalorder %s8, 0
    %p49 = por %p47, %p48
    %p50 = scmp.ne.s32.totalorder %s39, %s42
    %p51 = scmp.eq.s32.totalorder %s13, 1
    %p52 = por %p50, %p51
    %p53 = scmp.ne.s32.totalorder %s42, %s43
    %p54 = scmp.eq.s32.totalorder %s13, 0
    %p55 = por %p53, %p54
    %p56 = scmp.ne.s32.totalorder %s42, %s43
    %p57 = scmp.eq.s32.totalorder %s14, 1
    %p58 = por %p56, %p57
    %p60 = scmp.ne.s32.totalorder %s43, %s59
    %p61 = scmp.eq.s32.totalorder %s14, 0
    %p62 = por %p60, %p61
    %s63 = ssub.s32 %s16, %s30
    %p64 = scmp.eq.s32.totalorder %s63, 0
    %s66 = sadd.s32 %s65, 1
    %s67 = scalar_select %p64, %s65, %s66
    %p70 = pneg %p64
    %p71 = scmp.eq.s32.totalorder %s8, 1
    %p72 = por %p70, %p71
    %p73 = scmp.ne.s32.totalorder %s65, %s68
    %p74 = scmp.eq.s32.totalorder %s8, 0
    %p75 = por %p73, %p74
    %p76 = scmp.ne.s32.totalorder %s65, %s68
    %p77 = scmp.eq.s32.totalorder %s13, 1
    %p78 = por %p76, %p77
    %p79 = scmp.ne.s32.totalorder %s68, %s69
    %p80 = scmp.eq.s32.totalorder %s13, 0
    %p81 = por %p79, %p80
    %p82 = scmp.ne.s32.totalorder %s68, %s69
    %p83 = scmp.eq.s32.totalorder %s14, 1
    %p84 = por %p82, %p83
    %p86 = scmp.ne.s32.totalorder %s69, %s85
    %p87 = scmp.eq.s32.totalorder %s14, 0
    %p88 = por %p86, %p87
    %s89 = ssub.s32 %s15, %s34
    %s90 = ssub.s32 %s16, %s30
    %s91 = sor.u32 %s89, %s90
    %s92 = ssub.s32 %s17, %s26
    %s93 = sor.u32 %s91, %s92
    %p94 = scmp.eq.s32.totalorder %s93, 0
    %s96 = sadd.s32 %s95, 1
    %s97 = scalar_select %p94, %s95, %s96
    %p100 = pneg %p94
    %p101 = scmp.eq.s32.totalorder %s8, 1
    %p102 = por %p100, %p101
    %p103 = scmp.ne.s32.totalorder %s95, %s98
    %p104 = scmp.eq.s32.totalorder %s8, 0
    %p105 = por %p103, %p104
    %p106 = scmp.ne.s32.totalorder %s95, %s98
    %p107 = scmp.eq.s32.totalorder %s13, 1
    %p108 = por %p106, %p107
    %p109 = scmp.ne.s32.totalorder %s98, %s99
    %p110 = scmp.eq.s32.totalorder %s13, 0
    %p111 = por %p109, %p110
    %p112 = scmp.ne.s32.totalorder %s98, %s99
    %p113 = scmp.eq.s32.totalorder %s14, 1
    %p114 = por %p112, %p113
    %p116 = scmp.ne.s32.totalorder %s99, %s115
    %p117 = scmp.eq.s32.totalorder %s14, 0
    %p118 = por %p116, %p117
    %p119 = scmp.le.s32.totalorder 1, %s8
    %p120 = scmp.lt.s32.totalorder %s8, 3
    %p121 = pnand %p119, %p120
    %p122 = pneg %p121
    // Predicated region
    $region9: #{conv_transpose1d.1} parent=5 // pred_check
      _
    $region10: #{conv_transpose1d.1} parent=5 // pred_check_branch
      %124 = sbr.rel (%p121) target = $region12
    $region11: #{conv_transpose1d.1} parent=5 // pred_region
      %s125 = ssub.s32 %s8, 1
      // Predicated region
      $region13: #{conv_transpose1d.1} parent=11 // pred_check
        %p126 = pneg %p81
      $region14: #{conv_transpose1d.1} parent=11 // pred_check_branch
        %128 = sbr.rel (%p126) target = $region16
      $region15: #{conv_transpose1d.1} parent=11 // pred_region
        %p129 = scmp.lt.s32.totalorder %s19, 0
        %s130 = scalar_select %p129, %s19, 0
        %s131 = smul.addr %s130, 8
        %s132 = smul.addr %s131, 8
        %s133 = scalar_lea.vmem %s1, %s132
      $region16: #{conv_transpose1d.1} parent=11 // pred_fallthru
        _
    $region12: #{conv_transpose1d.1} parent=5 // pred_fallthru
      _
    %p134 = scmp.lt.s32.totalorder %s8, 2
    // Predicated region
    $region17: #{conv_transpose1d.1} parent=5 // pred_check
      %p135 = pneg %p134
    $region18: #{conv_transpose1d.1} parent=5 // pred_check_branch
      %137 = sbr.rel (%p135) target = $region20
    $region19: #{conv_transpose1d.1} parent=5 // pred_region
      // Predicated region
      $region21: #{conv_transpose1d.1} parent=19 // pred_check
        %p138 = pneg %p49
      $region22: #{conv_transpose1d.1} parent=19 // pred_check_branch
        %140 = sbr.rel (%p138) target = $region24
      $region23: #{conv_transpose1d.1} parent=19 // pred_region
        %p141 = scmp.lt.s32.totalorder %s15, 1
        %s142 = scalar_select %p141, %s15, 1
        %p143 = scmp.lt.s32.totalorder %s16, 0
        %s144 = scalar_select %p143, %s16, 0
        %s145 = sadd.s32 %s144, %s142
        %s146 = smul.addr %s145, 8
        %s147 = scalar_lea.vmem %s0, %s146
      $region24: #{conv_transpose1d.1} parent=19 // pred_fallthru
        _
    $region20: #{conv_transpose1d.1} parent=5 // pred_fallthru
      _
    %p148 = scmp.le.s32.totalorder 1, %s8
    %p149 = scmp.lt.s32.totalorder %s8, 3
    %p150 = pnand %p148, %p149
    %p151 = pneg %p150
    // Predicated region
    $region25: #{conv_transpose1d.1} parent=5 // pred_check
      _
    $region26: #{conv_transpose1d.1} parent=5 // pred_check_branch
      %153 = sbr.rel (%p150) target = $region28
    $region27: #{conv_transpose1d.1} parent=5 // pred_region
      %s154 = ssub.s32 %s8, 1
      %p155 = scmp.lt.s32.totalorder %s18, 1
      %s156 = scalar_select %p155, %s18, 1
      %p157 = scmp.lt.s32.totalorder %s19, 0
      %s158 = scalar_select %p157, %s19, 0
      %s159 = sadd.s32 %s158, %s156
      %s160 = smul.addr %s159, 8
      %s161 = scalar_lea.vmem %s0, %s160
      %p162 = pneg %p55
      %p163 = pneg %p52
      %p164 = scmp.lt.s32.totalorder %s19, 0
      %s165 = scalar_select %p164, %s19, 0
      %s166 = smul.addr %s165, 8
      %s167 = smul.addr %s166, 8
      %s168 = scalar_lea.vmem %s1, %s167
      %p169 = pneg %p81
      %p170 = pneg %p78
      %p171 = pneg %p111
      %p172 = pneg %p108
      %p173 = scmp.lt.s32.totalorder %s18, 1
      %s174 = scalar_select %p173, %s18, 1
      %p175 = scmp.lt.s32.totalorder %s19, 0
      %s176 = scalar_select %p175, %s19, 0
      %p177 = scmp.lt.s32.totalorder %s20, 0
      %s178 = scalar_select %p177, %s20, 0
      %s179 = smul.addr %s176, 4
      %s180 = sadd.s32 %s178, %s179
      %s181 = smul.addr %s174, 4
      %s182 = sadd.s32 %s180, %s181
      %s183 = smul.addr %s182, 8
      %s184 = scalar_lea.vmem %s2, %s183
      %p185 = scmp.lt.s32.totalorder %s18, 1
      %s186 = scalar_select %p185, %s18, 1
      %p187 = scmp.lt.s32.totalorder %s19, 0
      %s188 = scalar_select %p187, %s19, 0
      %s189 = sadd.s32 %s188, %s186
      %s190 = smul.addr %s189, 8
      %s191 = scalar_lea.vmem %s0, %s190
      %p192 = scmp.lt.s32.totalorder %s19, 0
      %s193 = scalar_select %p192, %s19, 0
      %s194 = smul.addr %s193, 8
      %s195 = smul.addr %s194, 8
      %s196 = scalar_lea.vmem %s1, %s195
      %p197 = scmp.lt.s32.totalorder %s18, 1
      %s198 = scalar_select %p197, %s18, 1
      %p199 = scmp.lt.s32.totalorder %s19, 0
      %s200 = scalar_select %p199, %s19, 0
      %p201 = scmp.lt.s32.totalorder %s20, 0
      %s202 = scalar_select %p201, %s20, 0
      %s203 = smul.addr %s200, 4
      %s204 = sadd.s32 %s202, %s203
      %s205 = smul.addr %s198, 4
      %s206 = sadd.s32 %s204, %s205
      %s207 = smul.addr %s206, 8
      %s208 = scalar_lea.vmem %s2, %s207
      %v209 = vld [vmem:[%s191] sm:$0xff]
      %v210 = vld [vmem:[%s196] sm:$0xff]
      %v211 = vld [vmem:[%s196 + $0x8] sm:$0xff]
      %213 = vrot.lane.b32.xlu0 %v209, 127
      %v214 = vpop.permute.xlu0 %213
      %vm216 = vcmask 64512
      %v218 = vsel %vm216, %v210, 0
      %v221 = vsel %vm216, %v211, 0
      %223 = vmatprep.subr.mxu0 0.0
      %224 = vmatpush1.msra.mxu0 %v214
      %225 = vmatprep.subr.mxu0 0.0
      %226 = vmatpush1.msra.mxu0 0.0
      %227 = vmatprep.subr.mxu0 0.0
      %228 = vmatpush1.msra.mxu0 0.0
      %229 = vmatprep.subr.mxu0 0.0
      %230 = vmatpush1.msra.mxu0 0.0
      %231 = vmatprep.subr.mxu0 0.0
      %232 = vmatpush1.msra.mxu0 0.0
      %233 = vmatprep.subr.mxu0 0.0
      %234 = vmatpush1.msra.mxu0 0.0
      %235 = vmatprep.subr.mxu0 0.0
      %236 = vmatpush1.msra.mxu0 0.0
      %237 = vmatprep.subr.mxu0 0.0
      %238 = vmatpush1.msra.mxu0 0.0
      %239 = vmatprep.subr.mxu0 0.0
      %240 = vmatpush1.msra.mxu0 0.0
      %241 = vmatprep.subr.mxu0 0.0
      %242 = vmatpush1.msra.mxu0 0.0
      %243 = vmatprep.subr.mxu0 0.0
      %244 = vmatpush1.msra.mxu0 0.0
      %245 = vmatprep.subr.mxu0 0.0
      %246 = vmatpush1.msra.mxu0 0.0
      %247 = vmatprep.subr.mxu0 0.0
      %248 = vmatpush1.msra.mxu0 0.0
      %249 = vmatprep.subr.mxu0 0.0
      %250 = vmatpush1.msra.mxu0 0.0
      %251 = vmatprep.subr.mxu0 0.0
      %252 = vmatpush1.msra.mxu0 0.0
      %253 = vmatprep.subr.mxu0 0.0
      %254 = vmatpush1.msra.mxu0 0.0
      %255 = vmatprep.subr.mxu0 0.0
      %256 = vmatpush1.msra.mxu0 0.0
      %257 = vmatprep.subr.mxu0 0.0
      %258 = vmatpush1.msra.mxu0 0.0
      %259 = vmatprep.subr.mxu0 0.0
      %260 = vmatpush1.msra.mxu0 0.0
      %261 = vmatprep.subr.mxu0 0.0
      %262 = vmatpush1.msra.mxu0 0.0
      %263 = vmatprep.subr.mxu0 0.0
      %264 = vmatpush1.msra.mxu0 0.0
      %265 = vmatprep.subr.mxu0 0.0
      %266 = vmatpush1.msra.mxu0 0.0
      %267 = vmatprep.subr.mxu0 0.0
      %268 = vmatpush1.msra.mxu0 0.0
      %269 = vmatprep.subr.mxu0 0.0
      %270 = vmatpush1.msra.mxu0 0.0
      %271 = vmatprep.subr.mxu0 0.0
      %272 = vmatpush1.msra.mxu0 0.0
      %273 = vmatprep.subr.mxu0 0.0
      %274 = vmatpush1.msra.mxu0 0.0
      %275 = vmatprep.subr.mxu0 0.0
      %276 = vmatpush1.msra.mxu0 0.0
      %277 = vmatprep.subr.mxu0 0.0
      %278 = vmatpush1.msra.mxu0 0.0
      %279 = vmatprep.subr.mxu0 0.0
      %280 = vmatpush1.msra.mxu0 0.0
      %281 = vmatprep.subr.mxu0 0.0
      %282 = vmatpush1.msra.mxu0 0.0
      %283 = vmatprep.subr.mxu0 0.0
      %284 = vmatpush1.msra.mxu0 0.0
      %285 = vmatprep.subr.mxu0 0.0
      %286 = vmatpush1.msra.mxu0 0.0
      %287 = vmatprep.mubr.f32.mxu0 0.0
      %288 = vmatmul.mubr.f32.gmra.mrb[0].mxu0 %v218
      %v289 = vpop.f32.mrb[0].mxu0
      %v290 = vadd.f32 0.0, %v289
      %v291 = vpop.f32.mrb[0].mxu0
      %292 = vmatprep.mubr.f32.mxu0 0.0
      %293 = vmatmul.mubr.f32.gmra.mrb[0].mxu0 %v221
      %v294 = vpop.f32.mrb[0].mxu0
      %v295 = vadd.f32 0.0, %v294
      %v296 = vpop.f32.mrb[0].mxu0
      %297 = vdwg.mxu0
      %vm298 = vcmask 130048
      %299 = vst.msk [vmem:[%s208] sm:$0xff] %vm298, %v290
      %300 = vst.msk [vmem:[%s208 + $0x8] sm:$0xff] %vm298, %v295
      %s301 = scalar_lea.vmem %s196, 32
      %v302 = vld [vmem:[%s301] sm:$0xff]
      %v303 = vld [vmem:[%s301 + $0x8] sm:$0xff]
      %s304 = scalar_lea.vmem %s196, 48
      %v305 = vld [vmem:[%s304] sm:$0xff]
      %v306 = vld [vmem:[%s304 + $0x8] sm:$0xff]
      %v308 = vsel %vm216, %v305, 0
      %v311 = vsel %vm216, %v306, 0
      %313 = vmatprep.subr.mxu0 0.0
      %314 = vmatpush1.msra.mxu0 %v214
      %315 = vmatprep.subr.mxu0 0.0
      %316 = vmatpush1.msra.mxu0 0.0
      %317 = vmatprep.subr.mxu0 0.0
      %318 = vmatpush1.msra.mxu0 0.0
      %319 = vmatprep.subr.mxu0 0.0
      %320 = vmatpush1.msra.mxu0 0.0
      %321 = vmatprep.subr.mxu0 0.0
      %322 = vmatpush1.msra.mxu0 0.0
      %323 = vmatprep.subr.mxu0 0.0
      %324 = vmatpush1.msra.mxu0 0.0
      %325 = vmatprep.subr.mxu0 0.0
      %326 = vmatpush1.msra.mxu0 0.0
      %327 = vmatprep.subr.mxu0 0.0
      %328 = vmatpush1.msra.mxu0 0.0
      %329 = vmatprep.subr.mxu0 0.0
      %330 = vmatpush1.msra.mxu0 0.0
      %331 = vmatprep.subr.mxu0 0.0
      %332 = vmatpush1.msra.mxu0 0.0
      %333 = vmatprep.subr.mxu0 0.0
      %334 = vmatpush1.msra.mxu0 0.0
      %335 = vmatprep.subr.mxu0 0.0
      %336 = vmatpush1.msra.mxu0 0.0
      %337 = vmatprep.subr.mxu0 0.0
      %338 = vmatpush1.msra.mxu0 0.0
      %339 = vmatprep.subr.mxu0 0.0
      %340 = vmatpush1.msra.mxu0 0.0
      %341 = vmatprep.subr.mxu0 0.0
      %342 = vmatpush1.msra.mxu0 0.0
      %343 = vmatprep.subr.mxu0 0.0
      %344 = vmatpush1.msra.mxu0 0.0
      %345 = vmatprep.subr.mxu0 0.0
      %346 = vmatpush1.msra.mxu0 0.0
      %347 = vmatprep.subr.mxu0 0.0
      %348 = vmatpush1.msra.mxu0 0.0
      %349 = vmatprep.subr.mxu0 0.0
      %350 = vmatpush1.msra.mxu0 0.0
      %351 = vmatprep.subr.mxu0 0.0
      %352 = vmatpush1.msra.mxu0 0.0
      %353 = vmatprep.subr.mxu0 0.0
      %354 = vmatpush1.msra.mxu0 0.0
      %355 = vmatprep.subr.mxu0 0.0
      %356 = vmatpush1.msra.mxu0 0.0
      %357 = vmatprep.subr.mxu0 0.0
      %358 = vmatpush1.msra.mxu0 0.0
      %359 = vmatprep.subr.mxu0 0.0
      %360 = vmatpush1.msra.mxu0 0.0
      %361 = vmatprep.subr.mxu0 0.0
      %362 = vmatpush1.msra.mxu0 0.0
      %363 = vmatprep.subr.mxu0 0.0
      %364 = vmatpush1.msra.mxu0 0.0
      %365 = vmatprep.subr.mxu0 0.0
      %366 = vmatpush1.msra.mxu0 0.0
      %367 = vmatprep.subr.mxu0 0.0
      %368 = vmatpush1.msra.mxu0 0.0
      %369 = vmatprep.subr.mxu0 0.0
      %370 = vmatpush1.msra.mxu0 0.0
      %371 = vmatprep.subr.mxu0 0.0
      %372 = vmatpush1.msra.mxu0 0.0
      %373 = vmatprep.subr.mxu0 0.0
      %374 = vmatpush1.msra.mxu0 0.0
      %375 = vmatprep.subr.mxu0 0.0
      %376 = vmatpush1.msra.mxu0 0.0
      %377 = vmatprep.mubr.f32.mxu0 0.0
      %378 = vmatmul.mubr.f32.gmra.mrb[0].mxu0 %v308
      %v379 = vpop.f32.mrb[0].mxu0
      %v380 = vadd.f32 0.0, %v379
      %v381 = vpop.f32.mrb[0].mxu0
      %382 = vmatprep.mubr.f32.mxu0 0.0
      %383 = vmatmul.mubr.f32.gmra.mrb[0].mxu0 %v311
      %v384 = vpop.f32.mrb[0].mxu0
      %v385 = vadd.f32 0.0, %v384
      %v386 = vpop.f32.mrb[0].mxu0
      %387 = vdwg.mxu0
      %388 = vrot.lane.b32.xlu0 %v209, 126
      %v389 = vpop.permute.xlu0 %388
      %v392 = vsel %vm216, %v302, 0
      %v395 = vsel %vm216, %v303, 0
      %397 = vmatprep.subr.mxu0 0.0
      %398 = vmatpush1.msra.mxu0 %v389
      %399 = vmatprep.subr.mxu0 0.0
      %400 = vmatpush1.msra.mxu0 0.0
      %401 = vmatprep.subr.mxu0 0.0
      %402 = vmatpush1.msra.mxu0 0.0
      %403 = vmatprep.subr.mxu0 0.0
      %404 = vmatpush1.msra.mxu0 0.0
      %405 = vmatprep.subr.mxu0 0.0
      %406 = vmatpush1.msra.mxu0 0.0
      %407 = vmatprep.subr.mxu0 0.0
      %408 = vmatpush1.msra.mxu0 0.0
      %409 = vmatprep.subr.mxu0 0.0
      %410 = vmatpush1.msra.mxu0 0.0
      %411 = vmatprep.subr.mxu0 0.0
      %412 = vmatpush1.msra.mxu0 0.0
      %413 = vmatprep.subr.mxu0 0.0
      %414 = vmatpush1.msra.mxu0 0.0
      %415 = vmatprep.subr.mxu0 0.0
      %416 = vmatpush1.msra.mxu0 0.0
      %417 = vmatprep.subr.mxu0 0.0
      %418 = vmatpush1.msra.mxu0 0.0
      %419 = vmatprep.subr.mxu0 0.0
      %420 = vmatpush1.msra.mxu0 0.0
      %421 = vmatprep.subr.mxu0 0.0
      %422 = vmatpush1.msra.mxu0 0.0
      %423 = vmatprep.subr.mxu0 0.0
      %424 = vmatpush1.msra.mxu0 0.0
      %425 = vmatprep.subr.mxu0 0.0
      %426 = vmatpush1.msra.mxu0 0.0
      %427 = vmatprep.subr.mxu0 0.0
      %428 = vmatpush1.msra.mxu0 0.0
      %429 = vmatprep.subr.mxu0 0.0
      %430 = vmatpush1.msra.mxu0 0.0
      %431 = vmatprep.subr.mxu0 0.0
      %432 = vmatpush1.msra.mxu0 0.0
      %433 = vmatprep.subr.mxu0 0.0
      %434 = vmatpush1.msra.mxu0 0.0
      %435 = vmatprep.subr.mxu0 0.0
      %436 = vmatpush1.msra.mxu0 0.0
      %437 = vmatprep.subr.mxu0 0.0
      %438 = vmatpush1.msra.mxu0 0.0
      %439 = vmatprep.subr.mxu0 0.0
      %440 = vmatpush1.msra.mxu0 0.0
      %441 = vmatprep.subr.mxu0 0.0
      %442 = vmatpush1.msra.mxu0 0.0
      %443 = vmatprep.subr.mxu0 0.0
      %444 = vmatpush1.msra.mxu0 0.0
      %445 = vmatprep.subr.mxu0 0.0
      %446 = vmatpush1.msra.mxu0 0.0
      %447 = vmatprep.subr.mxu0 0.0
      %448 = vmatpush1.msra.mxu0 0.0
      %449 = vmatprep.subr.mxu0 0.0
      %450 = vmatpush1.msra.mxu0 0.0
      %451 = vmatprep.subr.mxu0 0.0
      %452 = vmatpush1.msra.mxu0 0.0
      %453 = vmatprep.subr.mxu0 0.0
      %454 = vmatpush1.msra.mxu0 0.0
      %455 = vmatprep.subr.mxu0 0.0
      %456 = vmatpush1.msra.mxu0 0.0
      %457 = vmatprep.subr.mxu0 0.0
      %458 = vmatpush1.msra.mxu0 0.0
      %459 = vmatprep.subr.mxu0 0.0
      %460 = vmatpush1.msra.mxu0 0.0
      %461 = vmatprep.mubr.f32.mxu0 0.0
      %462 = vmatmul.mubr.f32.gmra.mrb[0].mxu0 %v392
      %v463 = vpop.f32.mrb[0].mxu0
      %v464 = vadd.f32 %v380, %v463
      %v465 = vpop.f32.mrb[0].mxu0
      %466 = vmatprep.mubr.f32.mxu0 0.0
      %467 = vmatmul.mubr.f32.gmra.mrb[0].mxu0 %v395
      %v468 = vpop.f32.mrb[0].mxu0
      %v469 = vadd.f32 %v385, %v468
      %v470 = vpop.f32.mrb[0].mxu0
      %471 = vdwg.mxu0
      %s472 = scalar_lea.vmem %s208, 16
      %473 = vst.msk [vmem:[%s472] sm:$0xff] %vm298, %v464
      %474 = vst.msk [vmem:[%s472 + $0x8] sm:$0xff] %vm298, %v469
      %p475 = scmp.lt.s32.totalorder %s18, 1
      %s476 = scalar_select %p475, %s18, 1
      %p477 = scmp.lt.s32.totalorder %s19, 0
      %s478 = scalar_select %p477, %s19, 0
      %p479 = scmp.lt.s32.totalorder %s20, 0
      %s480 = scalar_select %p479, %s20, 0
      %s481 = smul.addr %s478, 4
      %s482 = sadd.s32 %s480, %s481
      %s483 = smul.addr %s476, 4
      %s484 = sadd.s32 %s482, %s483
      %s485 = smul.addr %s484, 8
      %s486 = scalar_lea.vmem %s2, %s485
      // Predicated region
      $region29: #{conv_transpose1d.1} parent=27 // pred_check
        %p487 = pneg %p108
      $region30: #{conv_transpose1d.1} parent=27 // pred_check_branch
        %489 = sbr.rel (%p487) target = $region32
      $region31: #{conv_transpose1d.1} parent=27 // pred_region
        _
      $region32: #{conv_transpose1d.1} parent=27 // pred_fallthru
        _
    $region28: #{conv_transpose1d.1} parent=5 // pred_fallthru
      _
    %p490 = scmp.le.s32.totalorder 2, %s8
    // Predicated region
    $region33: #{conv_transpose1d.1} parent=5 // pred_check
      %p491 = pneg %p490
    $region34: #{conv_transpose1d.1} parent=5 // pred_check_branch
      %493 = sbr.rel (%p491) target = $region36
    $region35: #{conv_transpose1d.1} parent=5 // pred_region
      %s494 = ssub.s32 %s8, 2
      // Predicated region
      $region37: #{conv_transpose1d.1} parent=35 // pred_check
        %p495 = pneg %p114
      $region38: #{conv_transpose1d.1} parent=35 // pred_check_branch
        %497 = sbr.rel (%p495) target = $region40
      $region39: #{conv_transpose1d.1} parent=35 // pred_region
        %p498 = scmp.lt.s32.totalorder %s21, 1
        %s499 = scalar_select %p498, %s21, 1
        %p500 = scmp.lt.s32.totalorder %s22, 0
        %s501 = scalar_select %p500, %s22, 0
        %p502 = scmp.lt.s32.totalorder %s23, 0
        %s503 = scalar_select %p502, %s23, 0
        %s504 = smul.addr %s501, 4
        %s505 = sadd.s32 %s503, %s504
        %s506 = smul.addr %s499, 4
        %s507 = sadd.s32 %s505, %s506
        %s508 = smul.addr %s507, 8
        %s509 = scalar_lea.vmem %s2, %s508
      $region40: #{conv_transpose1d.1} parent=35 // pred_fallthru
        _
    $region36: #{conv_transpose1d.1} parent=5 // pred_fallthru
      _
  $region6: #{conv_transpose1d.1} parent=0 // loop_footer
    %s12 = sadd.s32 1, %s8
  $region7: #{conv_transpose1d.1} parent=0 // loop_footer_branch
    %7 = sbr.rel target = $region3
  $region8: #{conv_transpose1d.1} parent=0 // loop_exit
    _

</llo_original>
